<compile_context>
chip_gen: v6e
topology: v6e:2x2x1
jax: 0.10.0
libtpu: 0.0.40
codegen_flags: <defaults>
</compile_context>

<pallas_src>
import functools

import jax
import jax.numpy as jnp
from jax import lax
from jax.experimental import pallas as pl
from jax.experimental.pallas import tpu as pltpu


# Contract the last dim of both operands: f @ f.T without the transpose.
_CONTRACT_LAST = (((1,), (1,)), ((), ()))


def _pick_tk(M, K, itemsize, budget_bytes=24 << 20, cap=4096):
    """Largest K-tile that is a multiple of 128, divides K, fits the budget."""
    if K % 128 != 0:
        return K  # single full-K block (block dim == array dim is legal)
    fixed = 2 * M * M * 4                       # acc scratch + target gram
    avail = max(budget_bytes - fixed, 1 << 20)
    max_tk = (avail // (2 * M * itemsize)) // 128 * 128   # 2x = double buffer
    max_tk = int(min(max(max_tk, 128), cap, K))
    tk = 128
    t = 256
    while t <= max_tk:
        if K % t == 0:
            tk = t
        t += 128
    return tk


def _gram_kernel(feat_ref, gram_ref, acc_ref, *, inv_n):
    k = pl.program_id(0)

    @pl.when(k == 0)
    def _():
        acc_ref[...] = jnp.zeros_like(acc_ref)

    f = feat_ref[...]
    acc_ref[...] += lax.dot_general(
        f, f, dimension_numbers=_CONTRACT_LAST,
        preferred_element_type=jnp.float32)

    @pl.when(k == pl.num_programs(0) - 1)
    def _():
        gram_ref[...] = acc_ref[...] * inv_n


def _style_loss_kernel(feat_ref, target_ref, loss_ref, acc_ref, *, inv_n, inv_mm):
    k = pl.program_id(0)

    @pl.when(k == 0)
    def _():
        acc_ref[...] = jnp.zeros_like(acc_ref)

    f = feat_ref[...]
    acc_ref[...] += lax.dot_general(
        f, f, dimension_numbers=_CONTRACT_LAST,
        preferred_element_type=jnp.float32)

    @pl.when(k == pl.num_programs(0) - 1)
    def _():
        diff = acc_ref[...] * inv_n - target_ref[...]
        loss_ref[0] = jnp.sum(diff * diff) * inv_mm


def gram_matrix(x):
    """Pallas equivalent of the PyTorch gram_matrix() helper. x: (a,b,c,d)."""
    a, b, c, d = x.shape
    feats = x.reshape(a * b, c * d)
    M, K = feats.shape
    inv_n = 1.0 / float(a * b * c * d)
    tk = _pick_tk(M, K, feats.dtype.itemsize)
    nk = K // tk
    return pl.pallas_call(
        functools.partial(_gram_kernel, inv_n=inv_n),
        out_shape=jax.ShapeDtypeStruct((M, M), jnp.float32),
        grid_spec=pltpu.PrefetchScalarGridSpec(
            num_scalar_prefetch=0,
            grid=(nk,),
            in_specs=[pl.BlockSpec((M, tk), lambda k: (0, k))],
            out_specs=pl.BlockSpec((M, M), lambda k: (0, 0)),
            scratch_shapes=[pltpu.VMEM((M, M), jnp.float32)],
        ),
        compiler_params=pltpu.CompilerParams(
            dimension_semantics=("arbitrary",),
            vmem_limit_bytes=48 << 20,
        ),
    )(feats)


class StyleLoss:
    """JAX/Pallas mirror of the PyTorch StyleLoss module.

    __init__ stores the gram matrix of the target feature. forward(x) computes
    gram(x), the MSE loss vs the target gram, stores it in self.loss, and
    returns x unchanged (same semantics as the nn.Module).
    """

    def __init__(self, target_feature):
        self.target = gram_matrix(target_feature)  # (M, M) f32

    def forward(self, x):
        a, b, c, d = x.shape
        feats = x.reshape(a * b, c * d)
        M, K = feats.shape
        inv_n = 1.0 / float(a * b * c * d)
        inv_mm = 1.0 / float(M * M)
        tk = _pick_tk(M, K, feats.dtype.itemsize)
        nk = K // tk
        loss = pl.pallas_call(
            functools.partial(_style_loss_kernel, inv_n=inv_n, inv_mm=inv_mm),
            out_shape=jax.ShapeDtypeStruct((1,), jnp.float32),
            grid_spec=pltpu.PrefetchScalarGridSpec(
                num_scalar_prefetch=0,
                grid=(nk,),
                in_specs=[
                    pl.BlockSpec((M, tk), lambda k: (0, k)),
                    pl.BlockSpec((M, M), lambda k: (0, 0)),
                ],
                out_specs=pl.BlockSpec(memory_space=pltpu.MemorySpace.SMEM),
                scratch_shapes=[pltpu.VMEM((M, M), jnp.float32)],
            ),
            compiler_params=pltpu.CompilerParams(
                dimension_semantics=("arbitrary",),
                vmem_limit_bytes=48 << 20,
            ),
        )(feats, self.target)
        self.loss = loss[0]
        return x


if __name__ == "__main__":
    key = jax.random.PRNGKey(0)
    k_target, k_input = jax.random.split(key)

    a, b, c, d = 2, 4, 16, 16  # NCHW-style (batch, channels, H, W)
    target_feature = jax.random.normal(k_target, (a, b, c, d), dtype=jnp.float32)
    x = jax.random.normal(k_input, (a, b, c, d), dtype=jnp.float32)

    module = StyleLoss(target_feature)
    out = module.forward(x)

    jax.block_until_ready(out)
    jax.block_until_ready(module.loss)

    # Reference check in plain JAX.
    def ref_gram(t):
        aa, bb, cc, dd = t.shape
        f = t.reshape(aa * bb, cc * dd)
        return (f @ f.T) / (aa * bb * cc * dd)

    ref_loss = jnp.mean((ref_gram(x) - ref_gram(target_feature)) ** 2)
    assert jnp.allclose(out, x)
    assert jnp.allclose(module.loss, ref_loss, rtol=1e-4, atol=1e-6), (
        module.loss, ref_loss)
    assert jnp.allclose(module.target, ref_gram(target_feature),
                        rtol=1e-4, atol=1e-6)

    print("KERNEL_OK")
</pallas_src>

<mosaic_0001>
module attributes {stable_mosaic.version = 11 : i64} {
  func.func @_gram_kernel(%arg0: i32, %arg1: memref<8x256xf32, #tpu.memory_space<vmem>>, %arg2: memref<8x8xf32, #tpu.memory_space<vmem>>, %arg3: memref<8x8xf32, #tpu.memory_space<vmem>>) attributes {dimension_semantics = [#tpu.dimension_semantics<arbitrary>], iteration_bounds = array<i64: 1>, scalar_prefetch = 0 : i64, scratch_operands = 1 : i64, tpu.core_type = #tpu.core_type<tc>, window_params = [{transform_indices = @transform_0, window_bounds = array<i64: 8, 256>}, {pipeline_mode = #tpu.pipeline_mode<synchronous>, transform_indices = @transform_1, window_bounds = array<i64: 8, 8>}]} {
    %c0_i32 = arith.constant 0 : i32
    %0 = arith.cmpi eq, %arg0, %c0_i32 : i32
    %1 = arith.extui %0 : i1 to i32
    %c0_i32_0 = arith.constant 0 : i32
    %2 = arith.cmpi ne, %1, %c0_i32_0 : i32
    scf.if %2 {
      %cst_8 = arith.constant 0.000000e+00 : f32
      %11 = vector.broadcast %cst_8 : f32 to vector<8x8xf32>
      %c0_9 = arith.constant 0 : index
      %c0_10 = arith.constant 0 : index
      %12 = vector.load %arg3[%c0_9, %c0_10] : memref<8x8xf32, #tpu.memory_space<vmem>>, vector<8x8xf32>
      tpu.vector_store %arg3[%c0_9, %c0_10], %11 {strides = array<i32>} : memref<8x8xf32, #tpu.memory_space<vmem>>, vector<8x8xf32>,
    } else {
    }
    %c0 = arith.constant 0 : index
    %c0_1 = arith.constant 0 : index
    %3 = vector.load %arg1[%c0, %c0_1] : memref<8x256xf32, #tpu.memory_space<vmem>>, vector<8x256xf32>
    %c0_2 = arith.constant 0 : index
    %c0_3 = arith.constant 0 : index
    %4 = vector.load %arg3[%c0_2, %c0_3] : memref<8x8xf32, #tpu.memory_space<vmem>>, vector<8x8xf32>
    %cst = arith.constant dense<0.000000e+00> : vector<8x8xf32>
    %5 = tpu.matmul %3, %3, %cst {dimension_numbers = #tpu.dot_dimension_numbers<[1], [1], [0], [0], [0, 0, 1, 0], [], []>} : vector<8x256xf32>, vector<8x256xf32>, vector<8x8xf32> -> vector<8x8xf32>
    %6 = arith.addf %4, %5 : vector<8x8xf32>
    %c0_4 = arith.constant 0 : index
    %c0_5 = arith.constant 0 : index
    %7 = vector.load %arg3[%c0_4, %c0_5] : memref<8x8xf32, #tpu.memory_space<vmem>>, vector<8x8xf32>
    tpu.vector_store %arg3[%c0_4, %c0_5], %6 {strides = array<i32>} : memref<8x8xf32, #tpu.memory_space<vmem>>, vector<8x8xf32>,
    %c0_i32_6 = arith.constant 0 : i32
    %8 = arith.cmpi eq, %arg0, %c0_i32_6 : i32
    %9 = arith.extui %8 : i1 to i32
    %c0_i32_7 = arith.constant 0 : i32
    %10 = arith.cmpi ne, %9, %c0_i32_7 : i32
    scf.if %10 {
      %c0_8 = arith.constant 0 : index
      %c0_9 = arith.constant 0 : index
      %11 = vector.load %arg3[%c0_8, %c0_9] : memref<8x8xf32, #tpu.memory_space<vmem>>, vector<8x8xf32>
      %cst_10 = arith.constant 4.8828125E-4 : f32
      %12 = vector.broadcast %cst_10 : f32 to vector<8x8xf32>
      %13 = arith.mulf %11, %12 : vector<8x8xf32>
      %c0_11 = arith.constant 0 : index
      %c0_12 = arith.constant 0 : index
      %14 = vector.load %arg2[%c0_11, %c0_12] : memref<8x8xf32, #tpu.memory_space<vmem>>, vector<8x8xf32>
      tpu.vector_store %arg2[%c0_11, %c0_12], %13 {strides = array<i32>} : memref<8x8xf32, #tpu.memory_space<vmem>>, vector<8x8xf32>,
    } else {
    }
    return
  }
  func.func @transform_0(%arg0: i32) -> (i32, i32) {
    %c0_i32 = arith.constant 0 : i32
    %c0_i32_0 = arith.constant 0 : i32
    return %c0_i32, %arg0 : i32, i32
  }
  func.func @transform_1(%arg0: i32) -> (i32, i32) {
    %c0_i32 = arith.constant 0 : i32
    %c0_i32_0 = arith.constant 0 : i32
    %c0_i32_1 = arith.constant 0 : i32
    return %c0_i32, %c0_i32_0 : i32, i32
  }
}

</mosaic_0001>

<llo_original>
// kernel: tpu_custom_call.1
$region0: #{tpu_custom_call.1}
  #allocation0 [shape = 'u32[]', space=smem, size = 0x4, offset = 0x4, fixed_abs, tag = 'smem constant byte address 0x4 - core index']
  #allocation1 [shape = 'u32[144,128]{1,0:T(1,128)}', space=vmem, size = 0x12000, scoped, tag = 'internal scratch']
  #allocation2 [shape = 'f32[8,8]{1,0:T(8,128)}', space=vmem, size = 0x1000, scoped, tag = 'scratch operand']
  %s0 = inlined_call_operand.hbm [shape: f32[8,256], index: 0, kind: input, shape index: {}]
  %s1 = inlined_call_operand.hbm [shape: f32[8,8], index: 1, kind: output, shape index: {}]
  %s2 = sld [smem:[#allocation0]]
  $region26: #{tpu_custom_call.1} parent=0
    _
  %s4 = ssub.s32 1, %s2
  %s5 = scalar_select 0, %s4, %s2
  $region1: #{tpu_custom_call.1} parent=0
    #allocation3 [shape = 'u8[8192]{0}', space=vmem, size = 0x2000, scoped, tag = 'input window, operand 0, single buffered']
    #allocation4 [shape = 's32[1]{0}', space=sflag, size = 0x4, scoped, tag = 'scoped memory for tpu_custom_call.1']
    #allocation5 [shape = 's32[1]{0}', space=sflag, size = 0x4, scoped, tag = 'scoped memory for tpu_custom_call.1']
    #allocation6 [shape = 'u8[4096]{0}', space=vmem, size = 0x1000, scoped, tag = 'output window, operand 0, single buffered']
    %6 = vsyncpa [#allocation4], 0
    %7 = vsyncpa [#allocation5], 0
    // Predicated region
    $region2: #{tpu_custom_call.1} parent=1 // pred_check
      _
    $region3: #{tpu_custom_call.1} parent=1 // pred_check_branch
      %9 = sbr.rel (0) target = $region5
    $region4: #{tpu_custom_call.1} parent=1 // pred_region
      %s11 = ssub.s32 256, 256
      %12 = vsyncadd [#allocation4], %s11
      %s14 = sshll.u32 [#allocation3], 4
      %s15 = int_to_ptr.vmem [resolvable:$true] %s14
      %17 = dma.hbm_to_vmem [thread:$0]  %s0, 256, %s15, [#allocation4]
    $region5: #{tpu_custom_call.1} parent=1 // pred_fallthru
      _
    // Predicated region
    $region6: #{tpu_custom_call.1} parent=1 // pred_check
      _
    $region7: #{tpu_custom_call.1} parent=1 // pred_check_branch
      %19 = sbr.rel (0) target = $region9
    $region8: #{tpu_custom_call.1} parent=1 // pred_region
      %20 = dma.done [#allocation4], 256
    $region9: #{tpu_custom_call.1} parent=1 // pred_fallthru
      _
    %p21 = scmp.eq.s32.totalorder 0, 0
    // Predicated region
    $region10: #{tpu_custom_call.1} parent=1 // pred_check
      %p22 = pneg %p21
    $region11: #{tpu_custom_call.1} parent=1 // pred_check_branch
      %24 = sbr.rel (%p22) target = $region13
    $region12: #{tpu_custom_call.1} parent=1 // pred_region
      %vm25 = vcmask 64512
      %26 = vst.msk [vmem:[#allocation2] sm:$0xff] %vm25, 0.0
    $region13: #{tpu_custom_call.1} parent=1 // pred_fallthru
      _
    %v27 = vld [vmem:[#allocation3] sm:$0xff]
    %v28 = vld [vmem:[#allocation3 + $0x8] sm:$0xff]
    %v29 = vld [vmem:[#allocation2] sm:$0xff]
    %30 = vmatprep.subr.mxu0 0.0
    %31 = vmatpush1.xpose.msra.mxu0 0.0
    %32 = vmatprep.subr.mxu0 0.0
    %33 = vmatpush1.xpose.msra.mxu0 0.0
    %34 = vmatprep.subr.mxu0 0.0
    %35 = vmatpush1.xpose.msra.mxu0 0.0
    %36 = vmatprep.subr.mxu0 0.0
    %37 = vmatpush1.xpose.msra.mxu0 0.0
    %38 = vmatprep.subr.mxu0 0.0
    %39 = vmatpush1.xpose.msra.mxu0 0.0
    %40 = vmatprep.subr.mxu0 0.0
    %41 = vmatpush1.xpose.msra.mxu0 0.0
    %42 = vmatprep.subr.mxu0 0.0
    %43 = vmatpush1.xpose.msra.mxu0 0.0
    %44 = vmatprep.subr.mxu0 0.0
    %45 = vmatpush1.xpose.msra.mxu0 0.0
    %46 = vmatprep.subr.mxu0 0.0
    %47 = vmatpush1.xpose.msra.mxu0 0.0
    %48 = vmatprep.subr.mxu0 0.0
    %49 = vmatpush1.xpose.msra.mxu0 0.0
    %50 = vmatprep.subr.mxu0 0.0
    %51 = vmatpush1.xpose.msra.mxu0 0.0
    %52 = vmatprep.subr.mxu0 0.0
    %53 = vmatpush1.xpose.msra.mxu0 0.0
    %54 = vmatprep.subr.mxu0 0.0
    %55 = vmatpush1.xpose.msra.mxu0 0.0
    %56 = vmatprep.subr.mxu0 0.0
    %57 = vmatpush1.xpose.msra.mxu0 0.0
    %58 = vmatprep.subr.mxu0 0.0
    %59 = vmatpush1.xpose.msra.mxu0 0.0
    %60 = vmatprep.subr.mxu0 %v28
    %61 = vmatpush1.xpose.msra.mxu0 %v27
    %62 = vmatprep.subr.mxu0 0.0
    %63 = vmatpush2.xpose.msra.mxu0 0.0
    %64 = vmatprep.subr.mxu0 0.0
    %65 = vmatpush2.xpose.msra.mxu0 0.0
    %66 = vmatprep.subr.mxu0 0.0
    %67 = vmatpush2.xpose.msra.mxu0 0.0
    %68 = vmatprep.subr.mxu0 0.0
    %69 = vmatpush2.xpose.msra.mxu0 0.0
    %70 = vmatprep.subr.mxu0 0.0
    %71 = vmatpush2.xpose.msra.mxu0 0.0
    %72 = vmatprep.subr.mxu0 0.0
    %73 = vmatpush2.xpose.msra.mxu0 0.0
    %74 = vmatprep.subr.mxu0 0.0
    %75 = vmatpush2.xpose.msra.mxu0 0.0
    %76 = vmatprep.subr.mxu0 0.0
    %77 = vmatpush2.xpose.msra.mxu0 0.0
    %78 = vmatprep.subr.mxu0 0.0
    %79 = vmatpush2.xpose.msra.mxu0 0.0
    %80 = vmatprep.subr.mxu0 0.0
    %81 = vmatpush2.xpose.msra.mxu0 0.0
    %82 = vmatprep.subr.mxu0 0.0
    %83 = vmatpush2.xpose.msra.mxu0 0.0
    %84 = vmatprep.subr.mxu0 0.0
    %85 = vmatpush2.xpose.msra.mxu0 0.0
    %86 = vmatprep.subr.mxu0 0.0
    %87 = vmatpush2.xpose.msra.mxu0 0.0
    %88 = vmatprep.subr.mxu0 0.0
    %89 = vmatpush2.xpose.msra.mxu0 0.0
    %90 = vmatprep.subr.mxu0 0.0
    %91 = vmatpush2.xpose.msra.mxu0 0.0
    %92 = vmatprep.subr.mxu0 0.0
    %93 = vmatpush2.xpose.msra.mxu0 0.0
    %94 = vmatprep.mubr.f32.mxu0 %v28
    %95 = vmatmul.mubr.f32.gmra.mxu0 %v27
    %v96 = vpop.f32.mrf.mxu0
    %v97 = vadd.f32 0.0, %v96
    %v98 = vpop.f32.mrf.mxu0
    %99 = vdwg.mxu0
    %v100 = vadd.f32 %v29, %v97
    %vm101 = vcmask 64512
    %102 = vst.msk [vmem:[#allocation2] sm:$0xff] %vm101, %v100
    // Predicated region
    $region14: #{tpu_custom_call.1} parent=1 // pred_check
      %p103 = pneg %p21
    $region15: #{tpu_custom_call.1} parent=1 // pred_check_branch
      %105 = sbr.rel (%p103) target = $region17
    $region16: #{tpu_custom_call.1} parent=1 // pred_region
      %v106 = vld [vmem:[#allocation2] sm:$0xff]
      %v107 = vmul.f32 %v106, 0.00048828125
      %108 = vst.msk [vmem:[#allocation6] sm:$0xff] %vm101, %v107
    $region17: #{tpu_custom_call.1} parent=1 // pred_fallthru
      _
    // Predicated region
    $region18: #{tpu_custom_call.1} parent=1 // pred_check
      _
    $region19: #{tpu_custom_call.1} parent=1 // pred_check_branch
      %110 = sbr.rel (0) target = $region21
    $region20: #{tpu_custom_call.1} parent=1 // pred_region
      %s112 = ssub.s32 128, 128
      %113 = vsyncadd [#allocation5], %s112
      %s115 = sshll.u32 [#allocation6], 4
      %s116 = int_to_ptr.vmem [resolvable:$true] %s115
      %118 = dma.vmem_to_hbm [thread:$0]  %s116, 128, %s1, [#allocation5]
    $region21: #{tpu_custom_call.1} parent=1 // pred_fallthru
      _
    // Predicated region
    $region22: #{tpu_custom_call.1} parent=1 // pred_check
      _
    $region23: #{tpu_custom_call.1} parent=1 // pred_check_branch
      %120 = sbr.rel (0) target = $region25
    $region24: #{tpu_custom_call.1} parent=1 // pred_region
      %121 = dma.done [#allocation5], 128
    $region25: #{tpu_custom_call.1} parent=1 // pred_fallthru
      _
    %122 = vsyncpa [#allocation4], 1
    %123 = vsyncpa [#allocation5], 1

</llo_original>
